<compile_context>
chip_gen: v7x
topology: tpu7x:2x2x1
jax: 0.10.0
libtpu: 0.0.40
codegen_flags: <defaults>
</compile_context>

<pallas_src>
import functools

import jax
import jax.numpy as jnp
from jax import lax
from jax.experimental import pallas as pl
from jax.experimental.pallas import tpu as pltpu
import numpy as np


def _round_up(x, m):
    return ((x + m - 1) // m) * m


def _cdiv(a, b):
    return (a + b - 1) // b


_FOLD_CIN_MAX = 8          # fold all 16 taps into K when Cin is tiny (first conv)
_LANE_PAD_COUT_BELOW = 16  # lane-pad tiny Cout (the final 1-channel head) to 128
_VMEM_LIMIT = 48 * 1024 * 1024   # <= v7x physical VMEM, plenty on v5e/v6e


def _conv_geometry(H, W, stride):
    kw, pad = 4, 2
    Ho = (H + 2 * pad - kw) // stride + 1
    Wo = (W + 2 * pad - kw) // stride + 1
    n_d = (kw - 1) // stride + 1          # taps per axis within one stride phase
    return Ho, Wo, n_d


def _choose_TH(Ho, Wk, Ck, Cout_p, Q):
    # Fill the MXU M dimension (>= ~512 rows) and stream >= ~1 MiB of x per grid
    # step, while keeping the f32 accumulator and the double-buffered x block
    # comfortably inside VMEM.
    th = max(_cdiv(512, Wk), _cdiv(1 << 20, Q * Wk * max(Ck, 1) * 2), 1)
    acc_cap = max(1, (4 << 20) // (Wk * Cout_p * 4))
    x_cap = max(1, (8 << 20) // (Q * Wk * max(Ck, 1) * 2))
    return max(1, min(th, acc_cap, x_cap, Ho))


# ------------------------------------------------------------------
# Pallas kernel 1: conv 4x4 (all taps unrolled in one grid step), bias folded
# into the accumulator init, optional fused LeakyReLU(0.2), optional fused
# BatchNorm partial statistics.
# ------------------------------------------------------------------
def _make_conv_kernel(Q, n_dx, M, act, has_bias, has_mask, fuse_stats):
    def kernel(*refs):
        idx = 0
        x_ref = refs[idx]; idx += 1            # (Q, 1, M, Ck)   bf16
        w_ref = refs[idx]; idx += 1            # (T, Ck, Cout_p) bf16, resident
        b_ref = None
        m_ref = None
        if has_bias:
            b_ref = refs[idx]; idx += 1        # (1, Cout_p) f32
        if has_mask:
            m_ref = refs[idx]; idx += 1        # (M, 1) f32 valid-column mask
        o_ref = refs[idx]; idx += 1            # (1, M, Cout_p)
        ps_ref = pq_ref = None
        if fuse_stats:
            ps_ref = refs[idx]                 # (1, Cout_p) f32 partial sum
            pq_ref = refs[idx + 1]             # (1, Cout_p) f32 partial sum-sq
            idx += 2
        acc_ref = refs[idx]                    # (M, Cout_p) f32 scratch

        if has_bias:
            acc_ref[...] = jnp.broadcast_to(b_ref[...], acc_ref.shape)
        else:
            acc_ref[...] = jnp.zeros_like(acc_ref)

        # Fully static tap loop: each tap is one bf16 MXU matmul with f32 accum.
        for q in range(Q):
            xq = x_ref[q, 0]                                   # (M, Ck)
            for dx in range(n_dx):
                wt = w_ref[q * n_dx + dx]                      # (Ck, Cout_p)
                if dx == 0:
                    acc_ref[...] += jnp.dot(
                        xq, wt, preferred_element_type=jnp.float32)
                else:
                    prod = jnp.dot(
                        xq[dx:, :], wt, preferred_element_type=jnp.float32)
                    acc_ref[pl.ds(0, M - dx), :] += prod

        z = acc_ref[...]
        if has_mask:
            z = z * m_ref[...]          # zero the junk (shift overflow) columns
        if act:
            z = jnp.where(z >= 0, z, 0.2 * z)
        o_ref[0] = z.astype(o_ref.dtype)
        if fuse_stats:
            ps_ref[...] = jnp.sum(z, axis=0, keepdims=True)
            pq_ref[...] = jnp.sum(z * z, axis=0, keepdims=True)

    return kernel


def prepare_layer_weights(layer):
    """Hoisted (once per parameter set) tap-weight rearrangement + bf16 cast."""
    w = layer['w']                       # (Cout, Cin, 4, 4) f32
    b = layer['b']                       # (Cout,)
    stride = layer['stride']
    Cout, Cin = int(w.shape[0]), int(w.shape[1])
    fold = Cin <= _FOLD_CIN_MAX
    Cout_p = 128 if Cout < _LANE_PAD_COUT_BELOW else Cout
    wp = jnp.pad(w, ((0, Cout_p - Cout), (0, 0), (0, 0), (0, 0)))
    bp = jnp.pad(b, ((0, Cout_p - Cout),)).astype(jnp.float32).reshape(1, Cout_p)

    if fold:
        # im2col channel order (ky, kx, c) -> single tap, K = 16*Cin
        wt = jnp.transpose(wp, (2, 3, 1, 0)).reshape(1, 16 * Cin, Cout_p)
        Q, n_dx = 1, 1
    else:
        s = stride
        n_d = (4 - 1) // s + 1
        taps = []
        for py in range(s):
            for px in range(s):
                for dy in range(n_d):
                    for dx in range(n_d):
                        ky, kx = s * dy + py, s * dx + px
                        taps.append(jnp.transpose(wp[:, :, ky, kx], (1, 0)))
        wt = jnp.stack(taps, axis=0)     # (16, Cin, Cout_p)
        Q, n_dx = s * s * n_d, n_d

    return dict(wt=wt.astype(jnp.bfloat16), bias=bp, Q=Q, n_dx=n_dx, fold=fold,
                Cout=Cout, Cout_p=Cout_p, Cin=Cin, stride=stride,
                bn=layer['bn'], act=layer['act'],
                gamma=layer['gamma'], beta=layer['beta'])


def conv2d_pallas(x_nhwc, prep, act, use_bias, want_stats,
                  out_dtype=jnp.bfloat16):
    """Conv2d(kw=4, pad=2) + optional bias / LeakyReLU / fused BN partial stats.

    Returns (y_flat, psum, pssq, meta); y_flat is in the junk-padded flat layout
    (NHb, TH*Wk, Cout_p) -- use _unflatten(meta) to recover (N, Ho, Wo, Cout).
    """
    N, H, W, C = x_nhwc.shape
    s = prep['stride']
    Ho, Wo, n_d = _conv_geometry(H, W, s)
    Q, n_dx = prep['Q'], prep['n_dx']
    Cout_p = prep['Cout_p']
    fold = prep['fold']
    wt = prep['wt']
    T, Ck = int(wt.shape[0]), int(wt.shape[1])
    assert T == Q * n_dx
    assert Ck == (16 * C if fold else C)

    Wk = Wo if fold else Wo + n_dx - 1
    TH = _choose_TH(Ho, Wk, Ck, Cout_p, Q)
    Hb = _cdiv(Ho, TH)
    Ho_pad = Hb * TH
    M_blk = TH * Wk
    NHb = N * Hb

    xp = jnp.pad(x_nhwc, ((0, 0), (2, 2), (2, 2), (0, 0))).astype(jnp.bfloat16)

    if fold:
        # Full im2col only for the tiny-Cin first layer: K = 16*Cin.
        cols = []
        for ky in range(4):
            for kx in range(4):
                sl = lax.slice(xp, (0, ky, kx, 0),
                               (N, ky + s * (Ho - 1) + 1,
                                kx + s * (Wo - 1) + 1, C),
                               (1, s, s, 1))            # (N, Ho, Wo, C)
                cols.append(sl)
        slab = jnp.concatenate(cols, axis=-1)            # (N, Ho, Wo, 16C)
        slab = jnp.pad(slab, ((0, 0), (0, Ho_pad - Ho), (0, 0), (0, 0)))
        xs = slab.reshape(1, NHb, M_blk, Ck)
    else:
        # Q = s*s*n_dy stride/row-phase slabs; dx handled by a static in-kernel
        # shift so the input is only rearranged once (no 16x im2col).
        slabs = []
        for py in range(s):
            for px in range(s):
                for dy in range(n_d):
                    r0 = py + s * dy
                    sl = lax.slice(xp, (0, r0, px, 0),
                                   (N, r0 + s * (Ho - 1) + 1,
                                    px + s * (Wk - 1) + 1, C),
                                   (1, s, s, 1))         # (N, Ho, Wk, C)
                    slabs.append(sl)
        slab = jnp.stack(slabs, axis=0)                  # (Q, N, Ho, Wk, C)
        slab = jnp.pad(slab, ((0, 0), (0, 0), (0, Ho_pad - Ho), (0, 0), (0, 0)))
        xs = slab.reshape(Q, NHb, M_blk, Ck)

    has_mask = bool(want_stats and (Wk > Wo))
    inputs = [xs, wt]
    in_specs = [pl.BlockSpec((Q, 1, M_blk, Ck), lambda j: (0, j, 0, 0)),
                pl.BlockSpec((T, Ck, Cout_p), lambda j: (0, 0, 0))]
    if use_bias:
        inputs.append(prep['bias'])
        in_specs.append(pl.BlockSpec((1, Cout_p), lambda j: (0, 0)))
    if has_mask:
        mask = (jnp.arange(M_blk) % Wk < Wo).astype(jnp.float32).reshape(M_blk, 1)
        inputs.append(mask)
        in_specs.append(pl.BlockSpec((M_blk, 1), lambda j: (0, 0)))

    if want_stats:
        out_shape = [jax.ShapeDtypeStruct((NHb, M_blk, Cout_p), out_dtype),
                     jax.ShapeDtypeStruct((NHb, Cout_p), jnp.float32),
                     jax.ShapeDtypeStruct((NHb, Cout_p), jnp.float32)]
        out_specs = [pl.BlockSpec((1, M_blk, Cout_p), lambda j: (j, 0, 0)),
                     pl.BlockSpec((1, Cout_p), lambda j: (j, 0)),
                     pl.BlockSpec((1, Cout_p), lambda j: (j, 0))]
    else:
        out_shape = jax.ShapeDtypeStruct((NHb, M_blk, Cout_p), out_dtype)
        out_specs = pl.BlockSpec((1, M_blk, Cout_p), lambda j: (j, 0, 0))

    res = pl.pallas_call(
        _make_conv_kernel(Q, n_dx, M_blk, act, use_bias, has_mask, want_stats),
        out_shape=out_shape,
        grid_spec=pltpu.PrefetchScalarGridSpec(
            num_scalar_prefetch=0,
            grid=(NHb,),
            in_specs=in_specs,
            out_specs=out_specs,
            scratch_shapes=[pltpu.VMEM((M_blk, Cout_p), jnp.float32)]),
        compiler_params=pltpu.CompilerParams(
            dimension_semantics=("parallel",),
            vmem_limit_bytes=_VMEM_LIMIT),
    )(*inputs)

    if want_stats:
        y_flat, psum, pssq = res
    else:
        y_flat, psum, pssq = res, None, None

    meta = dict(N=N, Hb=Hb, TH=TH, Ho=Ho, Wk=Wk, Wo=Wo,
                Cout=prep['Cout'], Cout_p=Cout_p)
    return y_flat, psum, pssq, meta


def _unflatten(y_flat, meta):
    N, Hb, TH = meta['N'], meta['Hb'], meta['TH']
    y = y_flat.reshape(N, Hb * TH, meta['Wk'], meta['Cout_p'])
    return y[:, :meta['Ho'], :meta['Wo'], :meta['Cout']]


# ------------------------------------------------------------------
# Pallas kernel 2: BatchNorm scale/shift + LeakyReLU(0.2) on the flat conv layout.
# (Statistics come from the conv epilogue; only the apply pass reads the data.)
# ------------------------------------------------------------------
def _bn_apply_kernel(y_ref, sc_ref, sh_ref, o_ref):
    z = y_ref[0].astype(jnp.float32) * sc_ref[...] + sh_ref[...]
    o_ref[0] = jnp.where(z >= 0, z, 0.2 * z).astype(o_ref.dtype)


def bn_lrelu_apply_pallas(y_flat, scale_p, shift_p, out_dtype=jnp.bfloat16):
    NHb, M_blk, Cout_p = y_flat.shape
    return pl.pallas_call(
        _bn_apply_kernel,
        out_shape=jax.ShapeDtypeStruct((NHb, M_blk, Cout_p), out_dtype),
        grid_spec=pltpu.PrefetchScalarGridSpec(
            num_scalar_prefetch=0,
            grid=(NHb,),
            in_specs=[pl.BlockSpec((1, M_blk, Cout_p), lambda j: (j, 0, 0)),
                      pl.BlockSpec((1, Cout_p), lambda j: (0, 0)),
                      pl.BlockSpec((1, Cout_p), lambda j: (0, 0))],
            out_specs=pl.BlockSpec((1, M_blk, Cout_p), lambda j: (j, 0, 0))),
        compiler_params=pltpu.CompilerParams(
            dimension_semantics=("parallel",)),
    )(y_flat, scale_p, shift_p)


# ------------------------------------------------------------------
# Pallas kernel 3: AvgPool2d(3, stride=2, padding=1, count_include_pad=False),
# one image (all channels) per grid step, W in lanes.
# ------------------------------------------------------------------
def _avgpool_kernel(x_ref, ic_ref, o_ref, *, Ho, Wo):
    acc = jnp.zeros(o_ref.shape[1:], jnp.float32)
    for dy in range(3):
        for dx in range(3):
            p = (dy % 2) * 2 + (dx % 2)
            acc = acc + x_ref[p, 0, :, dy // 2:dy // 2 + Ho, dx // 2:dx // 2 + Wo]
    o_ref[0] = acc * ic_ref[...]


def avgpool3x3_s2_pallas(x_nchw):
    N, C, H, W = x_nchw.shape
    Ho = (H + 2 - 3) // 2 + 1
    Wo = (W + 2 - 3) // 2 + 1
    xp = jnp.pad(x_nchw.astype(jnp.float32), ((0, 0), (0, 0), (1, 1), (1, 1)))

    phases = []
    for py in range(2):
        for px in range(2):
            ph = xp[:, :, py::2, px::2][:, :, :Ho + 1, :Wo + 1]
            ph = jnp.pad(ph, ((0, 0), (0, 0), (0, Ho + 1 - ph.shape[2]),
                              (0, Wo + 1 - ph.shape[3])))
            phases.append(ph)
    xph = jnp.stack(phases, axis=0)                     # (4, N, C, Ho+1, Wo+1)

    # count_include_pad=False valid-count map: tiny (Ho, Wo) array.
    r = jnp.arange(Ho) * 2
    c = jnp.arange(Wo) * 2
    rc = sum(((r + dy >= 1) & (r + dy <= H)).astype(jnp.float32) for dy in range(3))
    cc = sum(((c + dx >= 1) & (c + dx <= W)).astype(jnp.float32) for dx in range(3))
    inv_cnt = 1.0 / (rc[:, None] * cc[None, :])

    return pl.pallas_call(
        functools.partial(_avgpool_kernel, Ho=Ho, Wo=Wo),
        out_shape=jax.ShapeDtypeStruct((N, C, Ho, Wo), jnp.float32),
        grid_spec=pltpu.PrefetchScalarGridSpec(
            num_scalar_prefetch=0,
            grid=(N,),
            in_specs=[pl.BlockSpec((4, 1, C, Ho + 1, Wo + 1),
                                   lambda n: (0, n, 0, 0, 0)),
                      pl.BlockSpec((Ho, Wo), lambda n: (0, 0))],
            out_specs=pl.BlockSpec((1, C, Ho, Wo), lambda n: (n, 0, 0, 0))),
        compiler_params=pltpu.CompilerParams(
            dimension_semantics=("parallel",)),
    )(xph, inv_cnt)


# ------------------------------------------------------------------
# NLayerDiscriminator / MultiScaleDiscriminator forward (getIntermFeat=False)
# ------------------------------------------------------------------
def nlayer_forward(x_nchw, prep_layers):
    x = jnp.transpose(x_nchw, (0, 2, 3, 1))            # NHWC
    n_total = len(prep_layers)
    for li, lp in enumerate(prep_layers):
        is_last = li == n_total - 1
        out_dtype = jnp.float32 if is_last else jnp.bfloat16
        if lp['bn']:
            # Bias dropped (cancels exactly under training-mode BatchNorm);
            # per-channel sum / sum-of-squares fused into the conv epilogue.
            y_flat, psum, pssq, meta = conv2d_pallas(
                x, lp, act=False, use_bias=False, want_stats=True,
                out_dtype=jnp.bfloat16)
            C = lp['Cout']
            cnt = float(meta['N'] * meta['Ho'] * meta['Wo'])
            ssum = jnp.sum(psum, axis=0)[:C]
            ssq = jnp.sum(pssq, axis=0)[:C]
            mean = ssum / cnt
            # TODO(synk): E[x^2]-E[x]^2 in f32 can cancel badly for very large
            # N*Ho*Wo with strongly non-zero means; switch to a shifted/two-pass
            # formulation if run at production image sizes.
            var = jnp.maximum(ssq / cnt - mean * mean, 0.0)
            scale = lp['gamma'].astype(jnp.float32) * lax.rsqrt(var + 1e-5)
            shift = lp['beta'].astype(jnp.float32) - mean * scale
            Cout_p = meta['Cout_p']
            scale_p = jnp.pad(scale, (0, Cout_p - C)).reshape(1, Cout_p)
            shift_p = jnp.pad(shift, (0, Cout_p - C)).reshape(1, Cout_p)
            y_flat = bn_lrelu_apply_pallas(y_flat, scale_p, shift_p,
                                           out_dtype=out_dtype)
            x = _unflatten(y_flat, meta)
        else:
            y_flat, _, _, meta = conv2d_pallas(
                x, lp, act=lp['act'], use_bias=True, want_stats=False,
                out_dtype=out_dtype)
            x = _unflatten(y_flat, meta)
    return jnp.transpose(x, (0, 3, 1, 2))              # back to NCHW


def multiscale_forward(x_nchw, prep_all, num_D):
    results = []
    x = x_nchw
    for i in range(num_D):
        layers = prep_all[num_D - 1 - i]
        results.append([nlayer_forward(x, layers)])
        if i != num_D - 1:
            x = avgpool3x3_s2_pallas(x)
    return results


# ------------------------------------------------------------------
# Deterministic parameter construction (matches nn.Module __init__ shapes)
# ------------------------------------------------------------------
def build_params(key, input_nc, ndf, n_layers, num_D):
    params = []
    for d in range(num_D):
        layers = []
        cfgs = [(input_nc, ndf, 2, False, True)]
        nf = ndf
        for n in range(1, n_layers):
            nf_prev, nf = nf, min(nf * 2, 512)
            cfgs.append((nf_prev, nf, 2, True, True))
        nf_prev, nf = nf, min(nf * 2, 512)
        cfgs.append((nf_prev, nf, 1, True, True))
        cfgs.append((nf, 1, 1, False, False))

        for l, (cin, cout, stride, bn, act) in enumerate(cfgs):
            k = jax.random.fold_in(jax.random.fold_in(key, d), l)
            kw_, kb, kg, kbeta = jax.random.split(k, 4)
            layers.append({
                'w': 0.05 * jax.random.normal(kw_, (cout, cin, 4, 4), jnp.float32),
                'b': 0.05 * jax.random.normal(kb, (cout,), jnp.float32),
                'stride': stride, 'bn': bn, 'act': act,
                'gamma': 1.0 + 0.1 * jax.random.normal(kg, (cout,), jnp.float32),
                'beta': 0.1 * jax.random.normal(kbeta, (cout,), jnp.float32),
            })
        params.append(layers)
    return params


# ------------------------------------------------------------------
# Pure-JAX reference (f32, for sanity check)
# ------------------------------------------------------------------
def _ref_nlayer(x, layers):
    for layer in layers:
        x = lax.conv_general_dilated(
            x, layer['w'], (layer['stride'],) * 2, [(2, 2), (2, 2)],
            dimension_numbers=('NCHW', 'OIHW', 'NCHW'),
            precision=lax.Precision.HIGHEST)
        x = x + layer['b'][None, :, None, None]
        if layer['bn']:
            mean = jnp.mean(x, axis=(0, 2, 3), keepdims=True)
            var = jnp.var(x, axis=(0, 2, 3), keepdims=True)
            x = (x - mean) / jnp.sqrt(var + 1e-5)
            x = x * layer['gamma'][None, :, None, None] + layer['beta'][None, :, None, None]
        if layer['act']:
            x = jnp.where(x >= 0, x, 0.2 * x)
    return x


def _ref_avgpool(x):
    pads = [(0, 0), (0, 0), (1, 1), (1, 1)]
    s = lax.reduce_window(x, 0.0, lax.add, (1, 1, 3, 3), (1, 1, 2, 2), pads)
    c = lax.reduce_window(jnp.ones_like(x), 0.0, lax.add, (1, 1, 3, 3), (1, 1, 2, 2), pads)
    return s / c


def _ref_multiscale(x, params, num_D):
    results, xd = [], x
    for i in range(num_D):
        results.append([_ref_nlayer(xd, params[num_D - 1 - i])])
        if i != num_D - 1:
            xd = _ref_avgpool(xd)
    return results


if __name__ == "__main__":
    key = jax.random.PRNGKey(0)
    N, input_nc, H, W = 2, 4, 16, 16
    ndf, n_layers, num_D = 8, 3, 3

    kx_, kp = jax.random.split(key)
    x = jax.random.normal(kx_, (N, input_nc, H, W), jnp.float32)
    params = build_params(kp, input_nc, ndf, n_layers, num_D)
    # Hoisted once per parameter set: tap rearrangement, Cout lane-padding, bf16 cast.
    prep = [[prepare_layer_weights(l) for l in layers] for layers in params]

    out = multiscale_forward(x, prep, num_D)
    out = jax.block_until_ready(out)

    ref = jax.block_until_ready(_ref_multiscale(x, params, num_D))
    # Tolerance sized for bf16 MXU matmuls chained through three batch-norms
    # (the f32 reference uses exact-precision convolutions).
    for o_scale, r_scale in zip(out, ref):
        for o, r in zip(o_scale, r_scale):
            assert o.shape == r.shape, (o.shape, r.shape)
            np.testing.assert_allclose(np.asarray(o, dtype=np.float32),
                                       np.asarray(r), rtol=1e-1, atol=1e-1)
    print("KERNEL_OK")
</pallas_src>

<mosaic_0001>
module attributes {stable_mosaic.version = 11 : i64} {
  func.func @kernel(%arg0: i32, %arg1: memref<1x1x81x64xbf16, #tpu.memory_space<vmem>>, %arg2: memref<1x64x128xbf16, #tpu.memory_space<vmem>>, %arg3: memref<1x128xf32, #tpu.memory_space<vmem>>, %arg4: memref<1x81x128xbf16, #tpu.memory_space<vmem>>, %arg5: memref<81x128xf32, #tpu.memory_space<vmem>>) attributes {dimension_semantics = [#tpu.dimension_semantics<parallel>], iteration_bounds = array<i64: 2>, scalar_prefetch = 0 : i64, scratch_operands = 1 : i64, tpu.core_type = #tpu.core_type<tc>, window_params = [{transform_indices = @transform_0, window_bounds = array<i64: 1, 1, 81, 64>}, {pipeline_mode = #tpu.pipeline_mode<synchronous>, transform_indices = @transform_1, window_bounds = array<i64: 1, 64, 128>}, {pipeline_mode = #tpu.pipeline_mode<synchronous>, transform_indices = @transform_2, window_bounds = array<i64: 1, 128>}, {transform_indices = @transform_3, window_bounds = array<i64: 1, 81, 128>}]} {
    %c0 = arith.constant 0 : index
    %c0_0 = arith.constant 0 : index
    %0 = vector.load %arg3[%c0, %c0_0] : memref<1x128xf32, #tpu.memory_space<vmem>>, vector<1x128xf32>
    %1 = vector.shape_cast %0 : vector<1x128xf32> to vector<1x128xf32>
    %2 = vector.broadcast %1 : vector<1x128xf32> to vector<81x128xf32>
    %c0_1 = arith.constant 0 : index
    %c0_2 = arith.constant 0 : index
    %3 = vector.load %arg5[%c0_1, %c0_2] : memref<81x128xf32, #tpu.memory_space<vmem>>, vector<81x128xf32>
    tpu.vector_store %arg5[%c0_1, %c0_2], %2 {strides = array<i32>} : memref<81x128xf32, #tpu.memory_space<vmem>>, vector<81x128xf32>,
    %c0_3 = arith.constant 0 : index
    %c0_4 = arith.constant 0 : index
    %c0_5 = arith.constant 0 : index
    %c0_6 = arith.constant 0 : index
    %4 = vector.load %arg1[%c0_3, %c0_4, %c0_5, %c0_6] : memref<1x1x81x64xbf16, #tpu.memory_space<vmem>>, vector<1x1x81x64xbf16>
    %5 = vector.shape_cast %4 : vector<1x1x81x64xbf16> to vector<81x64xbf16>
    %c0_7 = arith.constant 0 : index
    %c0_8 = arith.constant 0 : index
    %c0_9 = arith.constant 0 : index
    %6 = vector.load %arg2[%c0_7, %c0_8, %c0_9] : memref<1x64x128xbf16, #tpu.memory_space<vmem>>, vector<1x64x128xbf16>
    %7 = vector.shape_cast %6 : vector<1x64x128xbf16> to vector<64x128xbf16>
    %c0_10 = arith.constant 0 : index
    %c0_11 = arith.constant 0 : index
    %8 = vector.load %arg5[%c0_10, %c0_11] : memref<81x128xf32, #tpu.memory_space<vmem>>, vector<81x128xf32>
    %cst = arith.constant dense<0.000000e+00> : vector<81x128xf32>
    %9 = tpu.matmul %5, %7, %cst {dimension_numbers = #tpu.dot_dimension_numbers<[1], [0], [0], [1], [0, 0, 1, 1], [], []>} : vector<81x64xbf16>, vector<64x128xbf16>, vector<81x128xf32> -> vector<81x128xf32>
    %10 = arith.addf %8, %9 : vector<81x128xf32>
    %c0_12 = arith.constant 0 : index
    %c0_13 = arith.constant 0 : index
    %11 = vector.load %arg5[%c0_12, %c0_13] : memref<81x128xf32, #tpu.memory_space<vmem>>, vector<81x128xf32>
    tpu.vector_store %arg5[%c0_12, %c0_13], %10 {strides = array<i32>} : memref<81x128xf32, #tpu.memory_space<vmem>>, vector<81x128xf32>,
    %c0_14 = arith.constant 0 : index
    %c0_15 = arith.constant 0 : index
    %12 = vector.load %arg5[%c0_14, %c0_15] : memref<81x128xf32, #tpu.memory_space<vmem>>, vector<81x128xf32>
    %cst_16 = arith.constant 0.000000e+00 : f32
    %13 = vector.broadcast %cst_16 : f32 to vector<81x128xf32>
    %14 = arith.cmpf oge, %12, %13 : vector<81x128xf32>
    %cst_17 = arith.constant 2.000000e-01 : f32
    %15 = vector.broadcast %cst_17 : f32 to vector<81x128xf32>
    %16 = arith.mulf %15, %12 : vector<81x128xf32>
    %17 = arith.select %14, %12, %16 : vector<81x128xi1>, vector<81x128xf32>
    %18 = arith.truncf %17 : vector<81x128xf32> to vector<81x128xbf16>
    %c0_18 = arith.constant 0 : index
    %c0_19 = arith.constant 0 : index
    %c0_20 = arith.constant 0 : index
    %19 = vector.load %arg4[%c0_18, %c0_19, %c0_20] : memref<1x81x128xbf16, #tpu.memory_space<vmem>>, vector<1x81x128xbf16>
    %20 = vector.shape_cast %19 : vector<1x81x128xbf16> to vector<81x128xbf16>
    %21 = vector.shape_cast %18 : vector<81x128xbf16> to vector<1x81x128xbf16>
    tpu.vector_store %arg4[%c0_18, %c0_19, %c0_20], %21 {strides = array<i32>} : memref<1x81x128xbf16, #tpu.memory_space<vmem>>, vector<1x81x128xbf16>,
    return
  }
  func.func @transform_0(%arg0: i32) -> (i32, i32, i32, i32) {
    %c0_i32 = arith.constant 0 : i32
    %c0_i32_0 = arith.constant 0 : i32
    %c0_i32_1 = arith.constant 0 : i32
    %c0_i32_2 = arith.constant 0 : i32
    return %c0_i32, %arg0, %c0_i32_0, %c0_i32_1 : i32, i32, i32, i32
  }
  func.func @transform_1(%arg0: i32) -> (i32, i32, i32) {
    %c0_i32 = arith.constant 0 : i32
    %c0_i32_0 = arith.constant 0 : i32
    %c0_i32_1 = arith.constant 0 : i32
    %c0_i32_2 = arith.constant 0 : i32
    return %c0_i32, %c0_i32_0, %c0_i32_1 : i32, i32, i32
  }
  func.func @transform_2(%arg0: i32) -> (i32, i32) {
    %c0_i32 = arith.constant 0 : i32
    %c0_i32_0 = arith.constant 0 : i32
    %c0_i32_1 = arith.constant 0 : i32
    return %c0_i32, %c0_i32_0 : i32, i32
  }
  func.func @transform_3(%arg0: i32) -> (i32, i32, i32) {
    %c0_i32 = arith.constant 0 : i32
    %c0_i32_0 = arith.constant 0 : i32
    %c0_i32_1 = arith.constant 0 : i32
    return %arg0, %c0_i32, %c0_i32_0 : i32, i32, i32
  }
}

</mosaic_0001>

<llo_original>
// kernel: tpu_custom_call.1
$region0: #{tpu_custom_call.1}
  #allocation0 [shape = 'u32[]', space=smem, size = 0x4, offset = 0x4, fixed_abs, tag = 'smem constant byte address 0x4 - core index']
  #allocation1 [shape = 'u32[144,128]{1,0:T(1,128)}', space=vmem, size = 0x12000, scoped, tag = 'internal scratch']
  #allocation2 [shape = 'f32[81,128]{1,0:T(8,128)}', space=vmem, size = 0xb000, scoped, tag = 'scratch operand']
  %s0 = inlined_call_operand.vmem [shape: bf16[1,2,81,64], index: 0, kind: input, shape index: {}]
  %s1 = inlined_call_operand.vmem [shape: bf16[1,64,128], index: 1, kind: input, shape index: {}]
  %s2 = inlined_call_operand.vmem [shape: f32[1,128], index: 2, kind: input, shape index: {}]
  %s3 = inlined_call_operand.vmem [shape: bf16[2,81,128], index: 3, kind: output, shape index: {}]
  %s4 = sld [smem:[#allocation0]]
  $region45: #{tpu_custom_call.1} parent=0
    _
  %s6 = ssub.s32 1, %s4
  %s7 = scalar_select 0, %s6, %s4
  loop: start=0, step=1, limit=4
  $region2: #{tpu_custom_call.1} parent=0 // loop_pre_header
    _
  $region3: #{tpu_custom_call.1} parent=0 // loop_header
    %s9 = sphi 0, %s13
    %p10 = scmp.ge.s32.totalorder %s9, 4
    %s19 = sphi 0, %s21
    %s22 = sphi 0, %s19
    %s23 = sphi 0, %s22
    %s39 = sphi 0, %s23
    %s43 = sphi 0, %s43
    %s45 = sphi 0, %s43
    %s46 = sphi 0, %s45
    %s60 = sphi 0, %s46
    %s64 = sphi 0, %s64
    %s66 = sphi 0, %s64
    %s67 = sphi 0, %s66
    %s81 = sphi 0, %s67
    %s87 = sphi 0, %s89
    %s90 = sphi 0, %s87
    %s91 = sphi 0, %s90
    %s107 = sphi 0, %s91
  $region4: #{tpu_custom_call.1} parent=0 // loop_header_branch
    %12 = sbr.rel (%p10) target = $region8
  $region5: #{tpu_custom_call.1} parent=0 // loop_body
    %s14 = ssub.s32 %s9, 1
    %s15 = ssub.s32 %s9, 2
    %s16 = sadd.s32 %s9, 1
    %s17 = ssub.s32 %s9, %s16
    %p18 = scmp.eq.s32.totalorder %s17, 0
    %s20 = sadd.s32 %s19, 1
    %s21 = scalar_select %p18, %s19, %s20
    %p24 = pneg %p18
    %p25 = scmp.eq.s32.totalorder %s9, 1
    %p26 = por %p24, %p25
    %p27 = scmp.ne.s32.totalorder %s19, %s22
    %p28 = scmp.eq.s32.totalorder %s9, 0
    %p29 = por %p27, %p28
    %p30 = scmp.ne.s32.totalorder %s19, %s22
    %p31 = scmp.eq.s32.totalorder %s14, 1
    %p32 = por %p30, %p31
    %p33 = scmp.ne.s32.totalorder %s22, %s23
    %p34 = scmp.eq.s32.totalorder %s14, 0
    %p35 = por %p33, %p34
    %p36 = scmp.ne.s32.totalorder %s22, %s23
    %p37 = scmp.eq.s32.totalorder %s15, 1
    %p38 = por %p36, %p37
    %p40 = scmp.ne.s32.totalorder %s23, %s39
    %p41 = scmp.eq.s32.totalorder %s15, 0
    %p42 = por %p40, %p41
    %s44 = sadd.s32 %s43, 1
    %p47 = scmp.eq.s32.totalorder %s9, 1
    %p48 = scmp.ne.s32.totalorder %s43, %s45
    %p49 = scmp.eq.s32.totalorder %s9, 0
    %p50 = por %p48, %p49
    %p51 = scmp.ne.s32.totalorder %s43, %s45
    %p52 = scmp.eq.s32.totalorder %s14, 1
    %p53 = por %p51, %p52
    %p54 = scmp.ne.s32.totalorder %s45, %s46
    %p55 = scmp.eq.s32.totalorder %s14, 0
    %p56 = por %p54, %p55
    %p57 = scmp.ne.s32.totalorder %s45, %s46
    %p58 = scmp.eq.s32.totalorder %s15, 1
    %p59 = por %p57, %p58
    %p61 = scmp.ne.s32.totalorder %s46, %s60
    %p62 = scmp.eq.s32.totalorder %s15, 0
    %p63 = por %p61, %p62
    %s65 = sadd.s32 %s64, 1
    %p68 = scmp.eq.s32.totalorder %s9, 1
    %p69 = scmp.ne.s32.totalorder %s64, %s66
    %p70 = scmp.eq.s32.totalorder %s9, 0
    %p71 = por %p69, %p70
    %p72 = scmp.ne.s32.totalorder %s64, %s66
    %p73 = scmp.eq.s32.totalorder %s14, 1
    %p74 = por %p72, %p73
    %p75 = scmp.ne.s32.totalorder %s66, %s67
    %p76 = scmp.eq.s32.totalorder %s14, 0
    %p77 = por %p75, %p76
    %p78 = scmp.ne.s32.totalorder %s66, %s67
    %p79 = scmp.eq.s32.totalorder %s15, 1
    %p80 = por %p78, %p79
    %p82 = scmp.ne.s32.totalorder %s67, %s81
    %p83 = scmp.eq.s32.totalorder %s15, 0
    %p84 = por %p82, %p83
    %s85 = ssub.s32 %s9, %s16
    %p86 = scmp.eq.s32.totalorder %s85, 0
    %s88 = sadd.s32 %s87, 1
    %s89 = scalar_select %p86, %s87, %s88
    %p92 = pneg %p86
    %p93 = scmp.eq.s32.totalorder %s9, 1
    %p94 = por %p92, %p93
    %p95 = scmp.ne.s32.totalorder %s87, %s90
    %p96 = scmp.eq.s32.totalorder %s9, 0
    %p97 = por %p95, %p96
    %p98 = scmp.ne.s32.totalorder %s87, %s90
    %p99 = scmp.eq.s32.totalorder %s14, 1
    %p100 = por %p98, %p99
    %p101 = scmp.ne.s32.totalorder %s90, %s91
    %p102 = scmp.eq.s32.totalorder %s14, 0
    %p103 = por %p101, %p102
    %p104 = scmp.ne.s32.totalorder %s90, %s91
    %p105 = scmp.eq.s32.totalorder %s15, 1
    %p106 = por %p104, %p105
    %p108 = scmp.ne.s32.totalorder %s91, %s107
    %p109 = scmp.eq.s32.totalorder %s15, 0
    %p110 = por %p108, %p109
    %p111 = scmp.le.s32.totalorder 1, %s9
    %p112 = scmp.lt.s32.totalorder %s9, 3
    %p113 = pnand %p111, %p112
    %p114 = pneg %p113
    // Predicated region
    $region9: #{tpu_custom_call.1} parent=5 // pred_check
      _
    $region10: #{tpu_custom_call.1} parent=5 // pred_check_branch
      %116 = sbr.rel (%p113) target = $region12
    $region11: #{tpu_custom_call.1} parent=5 // pred_region
      %s117 = ssub.s32 %s9, 1
      // Predicated region
      $region13: #{tpu_custom_call.1} parent=11 // pred_check
        %p118 = pneg %p56
      $region14: #{tpu_custom_call.1} parent=11 // pred_check_branch
        %120 = sbr.rel (%p118) target = $region16
      $region15: #{tpu_custom_call.1} parent=11 // pred_region
        _
      $region16: #{tpu_custom_call.1} parent=11 // pred_fallthru
        _
      // Predicated region
      $region17: #{tpu_custom_call.1} parent=11 // pred_check
        %p121 = pneg %p77
      $region18: #{tpu_custom_call.1} parent=11 // pred_check_branch
        %123 = sbr.rel (%p121) target = $region20
      $region19: #{tpu_custom_call.1} parent=11 // pred_region
        _
      $region20: #{tpu_custom_call.1} parent=11 // pred_fallthru
        _
    $region12: #{tpu_custom_call.1} parent=5 // pred_fallthru
      _
    %p124 = scmp.lt.s32.totalorder %s9, 2
    // Predicated region
    $region21: #{tpu_custom_call.1} parent=5 // pred_check
      %p125 = pneg %p124
    $region22: #{tpu_custom_call.1} parent=5 // pred_check_branch
      %127 = sbr.rel (%p125) target = $region24
    $region23: #{tpu_custom_call.1} parent=5 // pred_region
      // Predicated region
      $region25: #{tpu_custom_call.1} parent=23 // pred_check
        %p128 = pneg %p29
      $region26: #{tpu_custom_call.1} parent=23 // pred_check_branch
        %130 = sbr.rel (%p128) target = $region28
      $region27: #{tpu_custom_call.1} parent=23 // pred_region
        %p131 = scmp.lt.s32.totalorder %s9, 1
        %s132 = scalar_select %p131, %s9, 1
        %s133 = smul.addr %s132, 11
        %s134 = smul.addr %s133, 4
        %s135 = scalar_lea.vmem %s0, %s134
      $region28: #{tpu_custom_call.1} parent=23 // pred_fallthru
        _
    $region24: #{tpu_custom_call.1} parent=5 // pred_fallthru
      _
    %p136 = scmp.le.s32.totalorder 1, %s9
    %p137 = scmp.lt.s32.totalorder %s9, 3
    %p138 = pnand %p136, %p137
    %p139 = pneg %p138
    // Predicated region
    $region29: #{tpu_custom_call.1} parent=5 // pred_check
      _
    $region30: #{tpu_custom_call.1} parent=5 // pred_check_branch
      %141 = sbr.rel (%p138) target = $region32
    $region31: #{tpu_custom_call.1} parent=5 // pred_region
      %s142 = ssub.s32 %s9, 1
      %p143 = scmp.lt.s32.totalorder %s14, 1
      %s144 = scalar_select %p143, %s14, 1
      %s145 = smul.addr %s144, 11
      %s146 = smul.addr %s145, 4
      %s147 = scalar_lea.vmem %s0, %s146
      %p148 = pneg %p35
      %p149 = pneg %p32
      %p150 = pneg %p56
      %p151 = pneg %p53
      %p152 = pneg %p77
      %p153 = pneg %p74
      %p154 = pneg %p103
      %p155 = pneg %p100
      %p156 = scmp.lt.s32.totalorder %s14, 1
      %s157 = scalar_select %p156, %s14, 1
      %s158 = smul.addr %s157, 11
      %s159 = smul.addr %s158, 4
      %s160 = scalar_lea.vmem %s3, %s159
      %p161 = scmp.lt.s32.totalorder %s14, 1
      %s162 = scalar_select %p161, %s14, 1
      %s163 = smul.addr %s162, 11
      %s164 = smul.addr %s163, 4
      %s165 = scalar_lea.vmem %s0, %s164
      %p166 = scmp.lt.s32.totalorder %s14, 1
      %s167 = scalar_select %p166, %s14, 1
      %s168 = smul.addr %s167, 11
      %s169 = smul.addr %s168, 4
      %s170 = scalar_lea.vmem %s3, %s169
      %v172 = vld [vmem:[%s2] sm:$0x1]
      %v174 = vlaneseq
      %v175 = vshrl.u32 %v174, 7
      %v176 = vsub.s32 0, %v175
      %v177 = vrot.slane %v172, %v176
      %179 = vst [vmem:[#allocation2] sm:$0xff] %v177
      %180 = vst [vmem:[#allocation2 + $0x8] sm:$0xff] %v177
      %181 = vst [vmem:[#allocation2 + $0x10] sm:$0xff] %v177
      %182 = vst [vmem:[#allocation2 + $0x18] sm:$0xff] %v177
      %183 = vst [vmem:[#allocation2 + $0x20] sm:$0xff] %v177
      %184 = vst [vmem:[#allocation2 + $0x28] sm:$0xff] %v177
      %185 = vst [vmem:[#allocation2 + $0x30] sm:$0xff] %v177
      %186 = vst [vmem:[#allocation2 + $0x38] sm:$0xff] %v177
      %187 = vst [vmem:[#allocation2 + $0x40] sm:$0xff] %v177
      %188 = vst [vmem:[#allocation2 + $0x48] sm:$0xff] %v177
      %189 = vst [vmem:[#allocation2 + $0x50] sm:$0x1] %v177
      %v190 = vld [vmem:[%s165] sm:$0xf]
      %v191 = vld [vmem:[%s165 + $0x4] sm:$0xf]
      %v192 = vld [vmem:[%s165 + $0x8] sm:$0xf]
      %v193 = vld [vmem:[%s165 + $0xc] sm:$0xf]
      %v194 = vld [vmem:[%s165 + $0x10] sm:$0xf]
      %v195 = vld [vmem:[%s165 + $0x14] sm:$0xf]
      %v196 = vld [vmem:[%s165 + $0x18] sm:$0xf]
      %v197 = vld [vmem:[%s165 + $0x1c] sm:$0xf]
      %v198 = vld [vmem:[%s165 + $0x20] sm:$0xf]
      %v199 = vld [vmem:[%s165 + $0x24] sm:$0xf]
      %v200 = vld [vmem:[%s165 + $0x28] sm:$0x1]
      %v201 = vld [vmem:[%s1] sm:$0xf]
      %v202 = vld [vmem:[%s1 + $0x4] sm:$0xf]
      %v203 = vld [vmem:[%s1 + $0x8] sm:$0xf]
      %v204 = vld [vmem:[%s1 + $0xc] sm:$0xf]
      %v205 = vld [vmem:[%s1 + $0x10] sm:$0xf]
      %v206 = vld [vmem:[%s1 + $0x14] sm:$0xf]
      %v207 = vld [vmem:[%s1 + $0x18] sm:$0xf]
      %v208 = vld [vmem:[%s1 + $0x1c] sm:$0xf]
      %v209 = vld [vmem:[#allocation2] sm:$0xff]
      %v210 = vld [vmem:[#allocation2 + $0x8] sm:$0xff]
      %v211 = vld [vmem:[#allocation2 + $0x10] sm:$0xff]
      %v212 = vld [vmem:[#allocation2 + $0x18] sm:$0xff]
      %v213 = vld [vmem:[#allocation2 + $0x20] sm:$0xff]
      %v214 = vld [vmem:[#allocation2 + $0x28] sm:$0xff]
      %v215 = vld [vmem:[#allocation2 + $0x30] sm:$0xff]
      %v216 = vld [vmem:[#allocation2 + $0x38] sm:$0xff]
      %v217 = vld [vmem:[#allocation2 + $0x40] sm:$0xff]
      %v218 = vld [vmem:[#allocation2 + $0x48] sm:$0xff]
      %v219 = vld [vmem:[#allocation2 + $0x50] sm:$0x1]
      %v231 = vunpack.c.l.b16 %v190
      %v232 = vunpack.c.l.b16 %v191
      %v233 = vunpack.c.l.b16 %v192
      %v234 = vunpack.c.l.b16 %v193
      %v235 = vunpack.c.l.b16 %v194
      %v236 = vunpack.c.l.b16 %v195
      %v237 = vunpack.c.l.b16 %v196
      %v238 = vunpack.c.l.b16 %v197
      %v239 = vunpack.c.l.b16 %v198
      %v240 = vunpack.c.l.b16 %v199
      %v241 = vunpack.c.l.b16 %v200
      %v242 = vpack.c.b16 %v232, %v231
      %v243 = vpack.c.b16 %v234, %v233
      %v244 = vpack.c.b16 %v236, %v235
      %v245 = vpack.c.b16 %v238, %v237
      %v246 = vpack.c.b16 %v240, %v239
      %v247 = vpack.c.b16 %v241, %v241
      %v256 = vunpack.c.l.b16 %v201
      %v257 = vunpack.c.l.b16 %v202
      %v258 = vunpack.c.l.b16 %v203
      %v259 = vunpack.c.l.b16 %v204
      %v260 = vunpack.c.l.b16 %v205
      %v261 = vunpack.c.l.b16 %v206
      %v262 = vunpack.c.l.b16 %v207
      %v263 = vunpack.c.l.b16 %v208
      %v264 = vpack.c.b16 %v257, %v256
      %v265 = vpack.c.b16 %v259, %v258
      %v266 = vpack.c.b16 %v261, %v260
      %v267 = vpack.c.b16 %v263, %v262
      %vm272 = vcmask 523264
      %v274 = vsel %vm272, %v242, 0
      %v277 = vsel %vm272, %v243, 0
      %v280 = vsel %vm272, %v244, 0
      %v283 = vsel %vm272, %v245, 0
      %v286 = vsel %vm272, %v246, 0
      %v289 = vsel %vm272, %v247, 0
      %291 = vmatprep.subr.bf16.mxu0 0
      %292 = vmatpush1.bf16.msra.mxu0 %v264
      %293 = vmatprep.subr.bf16.mxu0 0
      %294 = vmatpush1.bf16.msra.mxu0 %v265
      %295 = vmatprep.subr.bf16.mxu0 0
      %296 = vmatpush1.bf16.msra.mxu0 %v266
      %297 = vmatprep.subr.bf16.mxu0 0
      %298 = vmatpush1.bf16.msra.mxu0 %v267
      %299 = vmatprep.subr.bf16.mxu0 0
      %300 = vmatpush1.bf16.msra.mxu0 0
      %301 = vmatprep.subr.bf16.mxu0 0
      %302 = vmatpush1.bf16.msra.mxu0 0
      %303 = vmatprep.subr.bf16.mxu0 0
      %304 = vmatpush1.bf16.msra.mxu0 0
      %305 = vmatprep.subr.bf16.mxu0 0
      %306 = vmatpush1.bf16.msra.mxu0 0
      %307 = vmatprep.subr.bf16.mxu0 0
      %308 = vmatpush1.bf16.msra.mxu0 0
      %309 = vmatprep.subr.bf16.mxu0 0
      %310 = vmatpush1.bf16.msra.mxu0 0
      %311 = vmatprep.subr.bf16.mxu0 0
      %312 = vmatpush1.bf16.msra.mxu0 0
      %313 = vmatprep.subr.bf16.mxu0 0
      %314 = vmatpush1.bf16.msra.mxu0 0
      %315 = vmatprep.subr.bf16.mxu0 0
      %316 = vmatpush1.bf16.msra.mxu0 0
      %317 = vmatprep.subr.bf16.mxu0 0
      %318 = vmatpush1.bf16.msra.mxu0 0
      %319 = vmatprep.subr.bf16.mxu0 0
      %320 = vmatpush1.bf16.msra.mxu0 0
      %321 = vmatprep.subr.bf16.mxu0 0
      %322 = vmatpush1.bf16.msra.mxu0 0
      %323 = vmatprep.mubr.bf16.mxu0 0
      %324 = vmatmul.mubr.bf16.gmra.mrb[0].mxu0 %v274
      %v325 = vpop.f32.mrb[0].mxu0
      %v326 = vadd.f32 0.0, %v325
      %v327 = vpop.f32.mrb[0].mxu0
      %v328 = vpop.f32.mrb[0].mxu0
      %v329 = vadd.f32 0.0, %v328
      %v330 = vpop.f32.mrb[0].mxu0
      %331 = vmatprep.mubr.bf16.mxu0 0
      %332 = vmatmul.mubr.bf16.gmra.mrb[0].mxu0 %v277
      %v333 = vpop.f32.mrb[0].mxu0
      %v334 = vadd.f32 0.0, %v333
      %v335 = vpop.f32.mrb[0].mxu0
      %v336 = vpop.f32.mrb[0].mxu0
      %v337 = vadd.f32 0.0, %v336
      %v338 = vpop.f32.mrb[0].mxu0
      %339 = vmatprep.mubr.bf16.mxu0 0
      %340 = vmatmul.mubr.bf16.gmra.mrb[0].mxu0 %v280
      %v341 = vpop.f32.mrb[0].mxu0
      %v342 = vadd.f32 0.0, %v341
      %v343 = vpop.f32.mrb[0].mxu0
      %v344 = vpop.f32.mrb[0].mxu0
      %v345 = vadd.f32 0.0, %v344
      %v346 = vpop.f32.mrb[0].mxu0
      %347 = vmatprep.mubr.bf16.mxu0 0
      %348 = vmatmul.mubr.bf16.gmra.mrb[0].mxu0 %v283
      %v349 = vpop.f32.mrb[0].mxu0
      %v350 = vadd.f32 0.0, %v349
      %v351 = vpop.f32.mrb[0].mxu0
      %v352 = vpop.f32.mrb[0].mxu0
      %v353 = vadd.f32 0.0, %v352
      %v354 = vpop.f32.mrb[0].mxu0
      %355 = vmatprep.mubr.bf16.mxu0 0
      %356 = vmatmul.mubr.bf16.gmra.mrb[0].mxu0 %v286
      %v357 = vpop.f32.mrb[0].mxu0
      %v358 = vadd.f32 0.0, %v357
      %v359 = vpop.f32.mrb[0].mxu0
      %v360 = vpop.f32.mrb[0].mxu0
      %v361 = vadd.f32 0.0, %v360
      %v362 = vpop.f32.mrb[0].mxu0
      %363 = vmatprep.mubr.bf16.mxu0 0
      %364 = vmatmul.mubr.bf16.gmra.mrb[0].mxu0 %v289
      %v365 = vpop.f32.mrb[0].mxu0
      %v366 = vadd.f32 0.0, %v365
      %v367 = vpop.f32.mrb[0].mxu0
      %v368 = vpop.f32.mrb[0].mxu0
      %v369 = vpop.f32.mrb[0].mxu0
      %370 = vdwg.mxu0
      %v371 = vadd.f32 %v209, %v326
      %v372 = vadd.f32 %v210, %v329
      %v373 = vadd.f32 %v211, %v334
      %v374 = vadd.f32 %v212, %v337
      %v375 = vadd.f32 %v213, %v342
      %v376 = vadd.f32 %v214, %v345
      %v377 = vadd.f32 %v215, %v350
      %v378 = vadd.f32 %v216, %v353
      %v379 = vadd.f32 %v217, %v358
      %v380 = vadd.f32 %v218, %v361
      %v381 = vadd.f32 %v219, %v366
      %382 = vst [vmem:[#allocation2] sm:$0xff] %v371
      %383 = vst [vmem:[#allocation2 + $0x8] sm:$0xff] %v372
      %384 = vst [vmem:[#allocation2 + $0x10] sm:$0xff] %v373
      %385 = vst [vmem:[#allocation2 + $0x18] sm:$0xff] %v374
      %386 = vst [vmem:[#allocation2 + $0x20] sm:$0xff] %v375
      %387 = vst [vmem:[#allocation2 + $0x28] sm:$0xff] %v376
      %388 = vst [vmem:[#allocation2 + $0x30] sm:$0xff] %v377
      %389 = vst [vmem:[#allocation2 + $0x38] sm:$0xff] %v378
      %390 = vst [vmem:[#allocation2 + $0x40] sm:$0xff] %v379
      %391 = vst [vmem:[#allocation2 + $0x48] sm:$0xff] %v380
      %392 = vst [vmem:[#allocation2 + $0x50] sm:$0x1] %v381
      %v393 = vld [vmem:[#allocation2] sm:$0xff]
      %v394 = vld [vmem:[#allocation2 + $0x8] sm:$0xff]
      %v395 = vld [vmem:[#allocation2 + $0x10] sm:$0xff]
      %v396 = vld [vmem:[#allocation2 + $0x18] sm:$0xff]
      %v397 = vld [vmem:[#allocation2 + $0x20] sm:$0xff]
      %v398 = vld [vmem:[#allocation2 + $0x28] sm:$0xff]
      %v399 = vld [vmem:[#allocation2 + $0x30] sm:$0xff]
      %v400 = vld [vmem:[#allocation2 + $0x38] sm:$0xff]
      %v401 = vld [vmem:[#allocation2 + $0x40] sm:$0xff]
      %v402 = vld [vmem:[#allocation2 + $0x48] sm:$0xff]
      %v403 = vld [vmem:[#allocation2 + $0x50] sm:$0x1]
      %vm404 = vcmp.ge.f32.partialorder %v393, 0.0
      %vm405 = vcmp.ge.f32.partialorder %v394, 0.0
      %vm406 = vcmp.ge.f32.partialorder %v395, 0.0
      %vm407 = vcmp.ge.f32.partialorder %v396, 0.0
      %vm408 = vcmp.ge.f32.partialorder %v397, 0.0
      %vm409 = vcmp.ge.f32.partialorder %v398, 0.0
      %vm410 = vcmp.ge.f32.partialorder %v399, 0.0
      %vm411 = vcmp.ge.f32.partialorder %v400, 0.0
      %vm412 = vcmp.ge.f32.partialorder %v401, 0.0
      %vm413 = vcmp.ge.f32.partialorder %v402, 0.0
      %vm414 = vcmp.ge.f32.partialorder %v403, 0.0
      %v415 = vmul.f32 %v393, 0.2
      %v416 = vmul.f32 %v394, 0.2
      %v417 = vmul.f32 %v395, 0.2
      %v418 = vmul.f32 %v396, 0.2
      %v419 = vmul.f32 %v397, 0.2
      %v420 = vmul.f32 %v398, 0.2
      %v421 = vmul.f32 %v399, 0.2
      %v422 = vmul.f32 %v400, 0.2
      %v423 = vmul.f32 %v401, 0.2
      %v424 = vmul.f32 %v402, 0.2
      %v425 = vmul.f32 %v403, 0.2
      %v426 = vsel %vm404, %v393, %v415
      %v427 = vsel %vm405, %v394, %v416
      %v428 = vsel %vm406, %v395, %v417
      %v429 = vsel %vm407, %v396, %v418
      %v430 = vsel %vm408, %v397, %v419
      %v431 = vsel %vm409, %v398, %v420
      %v432 = vsel %vm410, %v399, %v421
      %v433 = vsel %vm411, %v400, %v422
      %v434 = vsel %vm412, %v401, %v423
      %v435 = vsel %vm413, %v402, %v424
      %v436 = vsel %vm414, %v403, %v425
      %v437 = vpack.c.bf16 %v427, %v426
      %v438 = vpack.c.bf16 %v429, %v428
      %v439 = vpack.c.bf16 %v431, %v430
      %v440 = vpack.c.bf16 %v433, %v432
      %v441 = vpack.c.bf16 %v435, %v434
      %v442 = vpack.c.bf16 %v436, %v436
      %v449 = vunpack.c.l.b16 %v437
      %v450 = vunpack.c.h.b16 %v437
      %v451 = vunpack.c.l.b16 %v438
      %v452 = vunpack.c.h.b16 %v438
      %v453 = vunpack.c.l.b16 %v439
      %v454 = vunpack.c.h.b16 %v439
      %v455 = vunpack.c.l.b16 %v440
      %v456 = vunpack.c.h.b16 %v440
      %v457 = vunpack.c.l.b16 %v441
      %v458 = vunpack.c.h.b16 %v441
      %v459 = vunpack.c.l.b16 %v442
      %v460 = vpack.c.b16 %v449, %v449
      %v461 = vpack.c.b16 %v450, %v450
      %v462 = vpack.c.b16 %v451, %v451
      %v463 = vpack.c.b16 %v452, %v452
      %v464 = vpack.c.b16 %v453, %v453
      %v465 = vpack.c.b16 %v454, %v454
      %v466 = vpack.c.b16 %v455, %v455
      %v467 = vpack.c.b16 %v456, %v456
      %v468 = vpack.c.b16 %v457, %v457
      %v469 = vpack.c.b16 %v458, %v458
      %v470 = vpack.c.b16 %v459, %v459
      %482 = vst [vmem:[%s170] sm:$0xf] %v460
      %483 = vst [vmem:[%s170 + $0x4] sm:$0xf] %v461
      %484 = vst [vmem:[%s170 + $0x8] sm:$0xf] %v462
      %485 = vst [vmem:[%s170 + $0xc] sm:$0xf] %v463
      %486 = vst [vmem:[%s170 + $0x10] sm:$0xf] %v464
      %487 = vst [vmem:[%s170 + $0x14] sm:$0xf] %v465
      %488 = vst [vmem:[%s170 + $0x18] sm:$0xf] %v466
      %489 = vst [vmem:[%s170 + $0x1c] sm:$0xf] %v467
      %490 = vst [vmem:[%s170 + $0x20] sm:$0xf] %v468
      %491 = vst [vmem:[%s170 + $0x24] sm:$0xf] %v469
      %vm492 = vcmask 1040384
      %vm493 = vsmask.f32 256
      %vm494 = vmand %vm492, %vm493
      %v495 = vld [vmem:[%s170 + $0x28] sm:$0x1]
      %v496 = vsel %vm494, %v470, %v495
      %497 = vst [vmem:[%s170 + $0x28] sm:$0x1] %v496
      %p498 = scmp.lt.s32.totalorder %s14, 1
      %s499 = scalar_select %p498, %s14, 1
      %s500 = smul.addr %s499, 11
      %s501 = smul.addr %s500, 4
      %s502 = scalar_lea.vmem %s3, %s501
      // Predicated region
      $region33: #{tpu_custom_call.1} parent=31 // pred_check
        %p503 = pneg %p100
      $region34: #{tpu_custom_call.1} parent=31 // pred_check_branch
        %505 = sbr.rel (%p503) target = $region36
      $region35: #{tpu_custom_call.1} parent=31 // pred_region
        _
      $region36: #{tpu_custom_call.1} parent=31 // pred_fallthru
        _
    $region32: #{tpu_custom_call.1} parent=5 // pred_fallthru
      _
    %p506 = scmp.le.s32.totalorder 2, %s9
    // Predicated region
    $region37: #{tpu_custom_call.1} parent=5 // pred_check
      %p507 = pneg %p506
    $region38: #{tpu_custom_call.1} parent=5 // pred_check_branch
      %509 = sbr.rel (%p507) target = $region40
    $region39: #{tpu_custom_call.1} parent=5 // pred_region
      %s510 = ssub.s32 %s9, 2
      // Predicated region
      $region41: #{tpu_custom_call.1} parent=39 // pred_check
        %p511 = pneg %p106
      $region42: #{tpu_custom_call.1} parent=39 // pred_check_branch
        %513 = sbr.rel (%p511) target = $region44
      $region43: #{tpu_custom_call.1} parent=39 // pred_region
        %p514 = scmp.lt.s32.totalorder %s15, 1
        %s515 = scalar_select %p514, %s15, 1
        %s516 = smul.addr %s515, 11
        %s517 = smul.addr %s516, 4
        %s518 = scalar_lea.vmem %s3, %s517
      $region44: #{tpu_custom_call.1} parent=39 // pred_fallthru
        _
    $region40: #{tpu_custom_call.1} parent=5 // pred_fallthru
      _
  $region6: #{tpu_custom_call.1} parent=0 // loop_footer
    %s13 = sadd.s32 1, %s9
  $region7: #{tpu_custom_call.1} parent=0 // loop_footer_branch
    %8 = sbr.rel target = $region3
  $region8: #{tpu_custom_call.1} parent=0 // loop_exit
    _

</llo_original>
